<compile_context>
chip_gen: v6e
topology: v6e:2x2x1
jax: 0.10.0
libtpu: 0.0.40
codegen_flags: <defaults>
</compile_context>

<pallas_src>
import jax
import jax.numpy as jnp
from jax import lax
from jax.experimental import pallas as pl
from jax.experimental.pallas import tpu as pltpu


_FAST_PATH_VMEM_BUDGET = 24 * 1024 * 1024   # double-buffered working-set cap (fits all gens)
_MIN_ROWS_FOR_KERNEL = 64                   # below this, plain jnp wins (latency-bound)


def _round_up(x, m):
    return ((x + m - 1) // m) * m


def _pick_tm(n, tm_default):
    """Row-tile size: large for DMA efficiency, multiple of 8 (or == n), and
    exposing >= 2 'parallel' grid steps when possible so both v7x TCs get work."""
    tm_default = max(8, _round_up(tm_default, 8))
    tm = tm_default if n > tm_default else n        # full dim is always a legal block dim
    if n >= 32 and pl.cdiv(n, tm) < 2:
        tm = _round_up(pl.cdiv(n, 2), 8)            # split so the parallel axis has 2 steps
    return tm


def _vmem_limit(need_bytes):
    # Derive the scoped-VMEM limit from the selected tiles (+ headroom); cap at
    # 48 MiB so a config tuned on v5e/v6e (128 MiB) cannot blow v7x's 64 MiB.
    return min(max(need_bytes + (4 << 20), 32 << 20), 48 << 20)


# ---------------------------------------------------------------------------
# Fast path: weight + bias VMEM-resident, 1-D grid over row tiles of x.
# ---------------------------------------------------------------------------
def _fast_kernel(x_ref, w_ref, b_ref, o_ref):
    # x tile: [tm, d_in]; w (PyTorch layout): [d_out, d_in] -> contract both on
    # axis 1 (x @ W^T) straight into the MXU; bias added once in f32.
    acc = lax.dot_general(
        x_ref[...], w_ref[...],
        dimension_numbers=(((1,), (1,)), ((), ())),
        preferred_element_type=jnp.float32,
    )
    o_ref[...] = (acc + b_ref[...].astype(jnp.float32)).astype(o_ref.dtype)


# ---------------------------------------------------------------------------
# General path: (i, j, k) tiling; f32 output block is the accumulator.
# ---------------------------------------------------------------------------
def _make_tiled_kernel(k_rem):
    def kernel(x_ref, w_ref, b_ref, o_ref):
        k = pl.program_id(2)

        @pl.when(k == 0)
        def _():
            # Initialise the VMEM-resident f32 output block with the bias:
            # no scratch accumulator, no epilogue copy/cast pass.
            o_ref[...] = jnp.broadcast_to(
                b_ref[...].astype(jnp.float32), o_ref.shape)

        x = x_ref[...]
        w = w_ref[...]
        if k_rem:
            # Ragged K tail: mask BOTH operands past the valid columns of the
            # last k block (stale VMEM there may be NaN/Inf; 0*NaN would
            # otherwise contaminate valid outputs).
            last = k == pl.num_programs(2) - 1
            limit = jnp.where(last, k_rem, x.shape[1])
            xl = lax.broadcasted_iota(jnp.int32, x.shape, 1)
            wl = lax.broadcasted_iota(jnp.int32, w.shape, 1)
            x = jnp.where(xl < limit, x, 0)
            w = jnp.where(wl < limit, w, 0)

        o_ref[...] += lax.dot_general(
            x, w,
            dimension_numbers=(((1,), (1,)), ((), ())),
            preferred_element_type=jnp.float32,
        )

    return kernel


def graph_embedding_forward(x, weight, bias, *, tm=512, tn=512, tk=512,
                            force_general=False):
    """y = x @ weight.T + bias   (matches torch.nn.Linear.forward).

    x:      [..., input_dim]
    weight: [embedding_dim, input_dim]   (PyTorch layout, consumed directly)
    bias:   [embedding_dim]
    """
    *lead, d_in = x.shape
    d_out, d_in_w = weight.shape
    assert d_in_w == d_in, "weight inner dim must match x inner dim"
    assert bias.shape == (d_out,)

    x2 = x.reshape(-1, d_in)
    n = x2.shape[0]

    # Tiny, latency-bound problems: skip the kernel entirely.
    if n < _MIN_ROWS_FOR_KERNEL and not force_general:
        out = (jnp.dot(x2, weight.T, precision=lax.Precision.HIGHEST)
               + bias).astype(x.dtype)
        return out.reshape(*lead, d_out)

    b2 = bias.reshape(1, d_out)
    x_isz = jnp.dtype(x.dtype).itemsize
    w_isz = jnp.dtype(weight.dtype).itemsize
    b_isz = jnp.dtype(bias.dtype).itemsize
    w_bytes = d_out * d_in * w_isz

    # ---------------- fast path: weight-resident, 1-D grid over row tiles ----
    if not force_general:
        for tm_try in (tm, 256, 128):
            tm_fast = _pick_tm(n, tm_try)
            need = 2 * (w_bytes + d_out * b_isz            # W + bias (resident)
                        + tm_fast * d_in * x_isz           # x tile (double-buffered)
                        + tm_fast * d_out * x_isz)         # y tile (double-buffered)
            if need > _FAST_PATH_VMEM_BUDGET:
                continue
            grid = (pl.cdiv(n, tm_fast),)
            cost = pl.CostEstimate(
                flops=2 * n * d_in * d_out,
                transcendentals=0,
                bytes_accessed=(n * d_in * x_isz + w_bytes + d_out * b_isz
                                + n * d_out * x_isz),
            )
            out = pl.pallas_call(
                _fast_kernel,
                out_shape=jax.ShapeDtypeStruct((n, d_out), x.dtype),
                grid_spec=pltpu.PrefetchScalarGridSpec(
                    num_scalar_prefetch=0,
                    grid=grid,
                    in_specs=[
                        # x row tile streams with the grid.
                        pl.BlockSpec((tm_fast, d_in), lambda i: (i, 0)),
                        # Weight & bias: constant block index -> DMA'd once, VMEM-resident.
                        pl.BlockSpec((d_out, d_in), lambda i: (0, 0)),
                        pl.BlockSpec((1, d_out), lambda i: (0, 0)),
                    ],
                    out_specs=pl.BlockSpec((tm_fast, d_out), lambda i: (i, 0)),
                ),
                compiler_params=pltpu.CompilerParams(
                    dimension_semantics=("parallel",),
                    vmem_limit_bytes=_vmem_limit(need),
                ),
                cost_estimate=cost,
            )(x2, weight, b2)
            return out.reshape(*lead, d_out)

    # ---------------- general path: (i, j, k) tiling for huge weights --------
    tm_g = _pick_tm(n, tm)
    tn_g = tn if d_out > tn else d_out           # full dim is always legal
    tk_g = tk if d_in > tk else d_in
    k_rem = d_in % tk_g                          # ragged K tail handled in-kernel
    grid = (pl.cdiv(n, tm_g), pl.cdiv(d_out, tn_g), pl.cdiv(d_in, tk_g))

    need = 2 * (tm_g * tk_g * x_isz + tn_g * tk_g * w_isz
                + tm_g * tn_g * 4 + tn_g * b_isz)
    cost = pl.CostEstimate(
        flops=2 * n * d_in * d_out,
        transcendentals=0,
        # This schedule re-streams W once per row tile and x once per column tile.
        bytes_accessed=(grid[0] * (w_bytes + d_out * b_isz)
                        + grid[1] * n * d_in * x_isz
                        + n * d_out * 4),
    )
    out = pl.pallas_call(
        _make_tiled_kernel(k_rem),
        out_shape=jax.ShapeDtypeStruct((n, d_out), jnp.float32),
        grid_spec=pltpu.PrefetchScalarGridSpec(
            num_scalar_prefetch=0,
            grid=grid,
            in_specs=[
                pl.BlockSpec((tm_g, tk_g), lambda i, j, k: (i, k)),
                pl.BlockSpec((tn_g, tk_g), lambda i, j, k: (j, k)),
                pl.BlockSpec((1, tn_g), lambda i, j, k: (0, j)),
            ],
            # Block index constant along k -> VMEM-resident accumulator.
            out_specs=pl.BlockSpec((tm_g, tn_g), lambda i, j, k: (i, j)),
        ),
        compiler_params=pltpu.CompilerParams(
            dimension_semantics=("parallel", "parallel", "arbitrary"),
            vmem_limit_bytes=_vmem_limit(need),
        ),
        cost_estimate=cost,
    )(x2, weight, b2)
    if out.dtype != x.dtype:
        out = out.astype(x.dtype)   # rare (non-f32 inputs); nn.Linear here is f32
    return out.reshape(*lead, d_out)


if __name__ == "__main__":
    key = jax.random.PRNGKey(0)

    def make_inputs(k, n, d_in, d_out):
        kx, kw, kb = jax.random.split(k, 3)
        bound = 1.0 / (d_in ** 0.5)   # mimic nn.Linear's uniform(-1/sqrt(fan_in), ...)
        x = jax.random.normal(kx, (n, d_in), dtype=jnp.float32)
        w = jax.random.uniform(kw, (d_out, d_in), minval=-bound, maxval=bound,
                               dtype=jnp.float32)
        b = jax.random.uniform(kb, (d_out,), minval=-bound, maxval=bound,
                               dtype=jnp.float32)
        return x, w, b

    def check(y, x, w, b):
        y_ref = jnp.einsum("nd,od->no", x, w,
                           precision=lax.Precision.HIGHEST) + b
        assert y.shape == y_ref.shape
        err = float(jnp.max(jnp.abs(y - y_ref)))
        assert jnp.allclose(y, y_ref, atol=1e-3, rtol=1e-3), err

    k1, k2, k3, k4 = jax.random.split(key, 4)

    # 1) Main case: weight-resident fast path (aligned small shapes).
    x, w, b = make_inputs(k1, 256, 64, 128)
    y = graph_embedding_forward(x, w, b)
    jax.block_until_ready(y)
    check(y, x, w, b)

    # 2) Unaligned shapes, no wrapper padding anywhere: partial row tiles and
    #    non-128-multiple feature dims (Pallas boundary masking handles them).
    x, w, b = make_inputs(k2, 200, 48, 96)
    y = graph_embedding_forward(x, w, b)
    jax.block_until_ready(y)
    check(y, x, w, b)

    # 3) General (i, j, k) tiled path with a ragged K remainder (forced here; it
    #    is normally only taken when W is too big to stay VMEM-resident).
    x, w, b = make_inputs(k3, 256, 640, 256)
    y = graph_embedding_forward(x, w, b, force_general=True)
    jax.block_until_ready(y)
    check(y, x, w, b)

    # 4) Tiny-problem fallback (plain jnp, no kernel launch).
    x, w, b = make_inputs(k4, 8, 32, 64)
    y = graph_embedding_forward(x, w, b)
    jax.block_until_ready(y)
    check(y, x, w, b)

    print("KERNEL_OK")
</pallas_src>

<mosaic_0001>
module attributes {stable_mosaic.version = 11 : i64} {
  func.func @_fast_kernel(%arg0: i32, %arg1: memref<128x64xf32, #tpu.memory_space<vmem>>, %arg2: memref<128x64xf32, #tpu.memory_space<vmem>>, %arg3: memref<1x128xf32, #tpu.memory_space<vmem>>, %arg4: memref<128x128xf32, #tpu.memory_space<vmem>>) attributes {dimension_semantics = [#tpu.dimension_semantics<parallel>], iteration_bounds = array<i64: 2>, scalar_prefetch = 0 : i64, scratch_operands = 0 : i64, tpu.core_type = #tpu.core_type<tc>, window_params = [{transform_indices = @transform_0, window_bounds = array<i64: 128, 64>}, {pipeline_mode = #tpu.pipeline_mode<synchronous>, transform_indices = @transform_1, window_bounds = array<i64: 128, 64>}, {pipeline_mode = #tpu.pipeline_mode<synchronous>, transform_indices = @transform_2, window_bounds = array<i64: 1, 128>}, {transform_indices = @transform_3, window_bounds = array<i64: 128, 128>}]} {
    %c0 = arith.constant 0 : index
    %c0_0 = arith.constant 0 : index
    %0 = vector.load %arg1[%c0, %c0_0] : memref<128x64xf32, #tpu.memory_space<vmem>>, vector<128x64xf32>
    %c0_1 = arith.constant 0 : index
    %c0_2 = arith.constant 0 : index
    %1 = vector.load %arg2[%c0_1, %c0_2] : memref<128x64xf32, #tpu.memory_space<vmem>>, vector<128x64xf32>
    %cst = arith.constant dense<0.000000e+00> : vector<128x128xf32>
    %2 = tpu.matmul %0, %1, %cst {dimension_numbers = #tpu.dot_dimension_numbers<[1], [1], [0], [0], [0, 0, 1, 0], [], []>} : vector<128x64xf32>, vector<128x64xf32>, vector<128x128xf32> -> vector<128x128xf32>
    %c0_3 = arith.constant 0 : index
    %c0_4 = arith.constant 0 : index
    %3 = vector.load %arg3[%c0_3, %c0_4] : memref<1x128xf32, #tpu.memory_space<vmem>>, vector<1x128xf32>
    %4 = vector.broadcast %3 : vector<1x128xf32> to vector<128x128xf32>
    %5 = arith.addf %2, %4 : vector<128x128xf32>
    %c0_5 = arith.constant 0 : index
    %c0_6 = arith.constant 0 : index
    %6 = vector.load %arg4[%c0_5, %c0_6] : memref<128x128xf32, #tpu.memory_space<vmem>>, vector<128x128xf32>
    tpu.vector_store %arg4[%c0_5, %c0_6], %5 {strides = array<i32>} : memref<128x128xf32, #tpu.memory_space<vmem>>, vector<128x128xf32>,
    return
  }
  func.func @transform_0(%arg0: i32) -> (i32, i32) {
    %c0_i32 = arith.constant 0 : i32
    %c0_i32_0 = arith.constant 0 : i32
    return %arg0, %c0_i32 : i32, i32
  }
  func.func @transform_1(%arg0: i32) -> (i32, i32) {
    %c0_i32 = arith.constant 0 : i32
    %c0_i32_0 = arith.constant 0 : i32
    %c0_i32_1 = arith.constant 0 : i32
    return %c0_i32, %c0_i32_0 : i32, i32
  }
  func.func @transform_2(%arg0: i32) -> (i32, i32) {
    %c0_i32 = arith.constant 0 : i32
    %c0_i32_0 = arith.constant 0 : i32
    %c0_i32_1 = arith.constant 0 : i32
    return %c0_i32, %c0_i32_0 : i32, i32
  }
  func.func @transform_3(%arg0: i32) -> (i32, i32) {
    %c0_i32 = arith.constant 0 : i32
    %c0_i32_0 = arith.constant 0 : i32
    return %arg0, %c0_i32 : i32, i32
  }
}

</mosaic_0001>

<llo_original>
// kernel: tpu_custom_call.1
$region0: #{tpu_custom_call.1}
  #allocation0 [shape = 'u32[]', space=smem, size = 0x4, offset = 0x4, fixed_abs, tag = 'smem constant byte address 0x4 - core index']
  #allocation1 [shape = 'u32[144,128]{1,0:T(1,128)}', space=vmem, size = 0x12000, scoped, tag = 'internal scratch']
  %s0 = inlined_call_operand.vmem [shape: f32[256,64], index: 0, kind: input, shape index: {}]
  %s1 = inlined_call_operand.vmem [shape: f32[128,64], index: 1, kind: input, shape index: {}]
  %s2 = inlined_call_operand.vmem [shape: f32[1,128], index: 2, kind: input, shape index: {}]
  %s3 = inlined_call_operand.hbm [shape: f32[256,128], index: 3, kind: output, shape index: {}]
  %s4 = sld [smem:[#allocation0]]
  $region45: #{tpu_custom_call.1} parent=0
    _
  %s6 = ssub.s32 1, %s4
  %s7 = scalar_select 0, %s6, %s4
  $region1: #{tpu_custom_call.1} parent=0
    #allocation2 [shape = 'u8[131072]{0}', space=vmem, size = 0x20000, scoped, tag = 'output window, operand 0']
    #allocation3 [shape = 's32[2]{0}', space=sflag, size = 0x8, scoped, tag = 'scoped memory for tpu_custom_call.1']
    %8 = vsyncpa [#allocation3], 0
    %s9 = scalar_lea.sflag [#allocation3], 1
    %10 = vsyncpa %s9, 0
    loop: start=0, step=1, limit=4
    $region2: #{tpu_custom_call.1} parent=1 // loop_pre_header
      _
    $region3: #{tpu_custom_call.1} parent=1 // loop_header
      %s12 = sphi 0, %s16
      %p13 = scmp.ge.s32.totalorder %s12, 4
      %s22 = sphi 0, %s24
      %s25 = sphi 0, %s22
      %s26 = sphi 0, %s25
      %s42 = sphi 0, %s26
      %s46 = sphi 0, %s46
      %s48 = sphi 0, %s46
      %s49 = sphi 0, %s48
      %s63 = sphi 0, %s49
      %s67 = sphi 0, %s67
      %s69 = sphi 0, %s67
      %s70 = sphi 0, %s69
      %s84 = sphi 0, %s70
      %s90 = sphi 0, %s92
      %s93 = sphi 0, %s90
      %s94 = sphi 0, %s93
      %s110 = sphi 0, %s94
    $region4: #{tpu_custom_call.1} parent=1 // loop_header_branch
      %15 = sbr.rel (%p13) target = $region8
    $region5: #{tpu_custom_call.1} parent=1 // loop_body
      %s17 = ssub.s32 %s12, 1
      %s18 = ssub.s32 %s12, 2
      %s19 = sadd.s32 %s12, 1
      %s20 = ssub.s32 %s12, %s19
      %p21 = scmp.eq.s32.totalorder %s20, 0
      %s23 = sadd.s32 %s22, 1
      %s24 = scalar_select %p21, %s22, %s23
      %p27 = pneg %p21
      %p28 = scmp.eq.s32.totalorder %s12, 1
      %p29 = por %p27, %p28
      %p30 = scmp.ne.s32.totalorder %s22, %s25
      %p31 = scmp.eq.s32.totalorder %s12, 0
      %p32 = por %p30, %p31
      %p33 = scmp.ne.s32.totalorder %s22, %s25
      %p34 = scmp.eq.s32.totalorder %s17, 1
      %p35 = por %p33, %p34
      %p36 = scmp.ne.s32.totalorder %s25, %s26
      %p37 = scmp.eq.s32.totalorder %s17, 0
      %p38 = por %p36, %p37
      %p39 = scmp.ne.s32.totalorder %s25, %s26
      %p40 = scmp.eq.s32.totalorder %s18, 1
      %p41 = por %p39, %p40
      %p43 = scmp.ne.s32.totalorder %s26, %s42
      %p44 = scmp.eq.s32.totalorder %s18, 0
      %p45 = por %p43, %p44
      %s47 = sadd.s32 %s46, 1
      %p50 = scmp.eq.s32.totalorder %s12, 1
      %p51 = scmp.ne.s32.totalorder %s46, %s48
      %p52 = scmp.eq.s32.totalorder %s12, 0
      %p53 = por %p51, %p52
      %p54 = scmp.ne.s32.totalorder %s46, %s48
      %p55 = scmp.eq.s32.totalorder %s17, 1
      %p56 = por %p54, %p55
      %p57 = scmp.ne.s32.totalorder %s48, %s49
      %p58 = scmp.eq.s32.totalorder %s17, 0
      %p59 = por %p57, %p58
      %p60 = scmp.ne.s32.totalorder %s48, %s49
      %p61 = scmp.eq.s32.totalorder %s18, 1
      %p62 = por %p60, %p61
      %p64 = scmp.ne.s32.totalorder %s49, %s63
      %p65 = scmp.eq.s32.totalorder %s18, 0
      %p66 = por %p64, %p65
      %s68 = sadd.s32 %s67, 1
      %p71 = scmp.eq.s32.totalorder %s12, 1
      %p72 = scmp.ne.s32.totalorder %s67, %s69
      %p73 = scmp.eq.s32.totalorder %s12, 0
      %p74 = por %p72, %p73
      %p75 = scmp.ne.s32.totalorder %s67, %s69
      %p76 = scmp.eq.s32.totalorder %s17, 1
      %p77 = por %p75, %p76
      %p78 = scmp.ne.s32.totalorder %s69, %s70
      %p79 = scmp.eq.s32.totalorder %s17, 0
      %p80 = por %p78, %p79
      %p81 = scmp.ne.s32.totalorder %s69, %s70
      %p82 = scmp.eq.s32.totalorder %s18, 1
      %p83 = por %p81, %p82
      %p85 = scmp.ne.s32.totalorder %s70, %s84
      %p86 = scmp.eq.s32.totalorder %s18, 0
      %p87 = por %p85, %p86
      %s88 = ssub.s32 %s12, %s19
      %p89 = scmp.eq.s32.totalorder %s88, 0
      %s91 = sadd.s32 %s90, 1
      %s92 = scalar_select %p89, %s90, %s91
      %p95 = pneg %p89
      %p96 = scmp.eq.s32.totalorder %s12, 1
      %p97 = por %p95, %p96
      %p98 = scmp.ne.s32.totalorder %s90, %s93
      %p99 = scmp.eq.s32.totalorder %s12, 0
      %p100 = por %p98, %p99
      %p101 = scmp.ne.s32.totalorder %s90, %s93
      %p102 = scmp.eq.s32.totalorder %s17, 1
      %p103 = por %p101, %p102
      %p104 = scmp.ne.s32.totalorder %s93, %s94
      %p105 = scmp.eq.s32.totalorder %s17, 0
      %p106 = por %p104, %p105
      %p107 = scmp.ne.s32.totalorder %s93, %s94
      %p108 = scmp.eq.s32.totalorder %s18, 1
      %p109 = por %p107, %p108
      %p111 = scmp.ne.s32.totalorder %s94, %s110
      %p112 = scmp.eq.s32.totalorder %s18, 0
      %p113 = por %p111, %p112
      %p114 = scmp.le.s32.totalorder 1, %s12
      %p115 = scmp.lt.s32.totalorder %s12, 3
      %p116 = pnand %p114, %p115
      %p117 = pneg %p116
      // Predicated region
      $region9: #{tpu_custom_call.1} parent=5 // pred_check
        _
      $region10: #{tpu_custom_call.1} parent=5 // pred_check_branch
        %119 = sbr.rel (%p116) target = $region12
      $region11: #{tpu_custom_call.1} parent=5 // pred_region
        %s120 = ssub.s32 %s12, 1
        // Predicated region
        $region13: #{tpu_custom_call.1} parent=11 // pred_check
          %p121 = pneg %p59
        $region14: #{tpu_custom_call.1} parent=11 // pred_check_branch
          %123 = sbr.rel (%p121) target = $region16
        $region15: #{tpu_custom_call.1} parent=11 // pred_region
          _
        $region16: #{tpu_custom_call.1} parent=11 // pred_fallthru
          _
        // Predicated region
        $region17: #{tpu_custom_call.1} parent=11 // pred_check
          %p124 = pneg %p80
        $region18: #{tpu_custom_call.1} parent=11 // pred_check_branch
          %126 = sbr.rel (%p124) target = $region20
        $region19: #{tpu_custom_call.1} parent=11 // pred_region
          _
        $region20: #{tpu_custom_call.1} parent=11 // pred_fallthru
          _
      $region12: #{tpu_custom_call.1} parent=5 // pred_fallthru
        _
      %p127 = scmp.lt.s32.totalorder %s12, 2
      // Predicated region
      $region21: #{tpu_custom_call.1} parent=5 // pred_check
        %p128 = pneg %p127
      $region22: #{tpu_custom_call.1} parent=5 // pred_check_branch
        %130 = sbr.rel (%p128) target = $region24
      $region23: #{tpu_custom_call.1} parent=5 // pred_region
        // Predicated region
        $region25: #{tpu_custom_call.1} parent=23 // pred_check
          %p131 = pneg %p32
        $region26: #{tpu_custom_call.1} parent=23 // pred_check_branch
          %133 = sbr.rel (%p131) target = $region28
        $region27: #{tpu_custom_call.1} parent=23 // pred_region
          %s134 = smul.u32 16, %s12
          %p135 = scmp.lt.s32.totalorder %s134, 31
          %s136 = scalar_select %p135, %s134, 31
          %s137 = smul.addr %s136, 8
          %s138 = scalar_lea.vmem %s0, %s137
          %s139 = smul.u32 16, %s12
        $region28: #{tpu_custom_call.1} parent=23 // pred_fallthru
          _
      $region24: #{tpu_custom_call.1} parent=5 // pred_fallthru
        _
      %p140 = scmp.le.s32.totalorder 1, %s12
      %p141 = scmp.lt.s32.totalorder %s12, 3
      %p142 = pnand %p140, %p141
      %p143 = pneg %p142
      // Predicated region
      $region29: #{tpu_custom_call.1} parent=5 // pred_check
        _
      $region30: #{tpu_custom_call.1} parent=5 // pred_check_branch
        %145 = sbr.rel (%p142) target = $region32
      $region31: #{tpu_custom_call.1} parent=5 // pred_region
        %s146 = ssub.s32 %s12, 1
        %s147 = smul.u32 16, %s17
        %p148 = scmp.lt.s32.totalorder %s147, 31
        %s149 = scalar_select %p148, %s147, 31
        %s150 = smul.addr %s149, 8
        %s151 = scalar_lea.vmem %s0, %s150
        %p152 = pneg %p38
        %p153 = pneg %p35
        %p154 = pneg %p59
        %p155 = pneg %p56
        %p156 = pneg %p80
        %p157 = pneg %p77
        %p158 = pneg %p106
        %p159 = pneg %p103
        %s160 = sand.u32 %s93, 1
        %s161 = scalar_lea.sflag [#allocation3], %s160
        %s162 = sand.u32 %s93, 1
        %s163 = smul.addr %s162, 128
        %s164 = scalar_lea.vmem [#allocation2], %s163
        %s165 = smul.u32 16, %s17
        %p166 = scmp.lt.s32.totalorder %s165, 31
        %s167 = scalar_select %p166, %s165, 31
        %s168 = smul.addr %s167, 8
        %s169 = scalar_lea.vmem %s0, %s168
        %s170 = smul.u32 16, %s17
        %s171 = smul.u32 16, %s17
        %v172 = vld [vmem:[%s169] sm:$0xff]
        %v173 = vld [vmem:[%s169 + $0x8] sm:$0xff]
        %v174 = vld [vmem:[%s169 + $0x10] sm:$0xff]
        %v175 = vld [vmem:[%s169 + $0x18] sm:$0xff]
        %v176 = vld [vmem:[%s169 + $0x20] sm:$0xff]
        %v177 = vld [vmem:[%s169 + $0x28] sm:$0xff]
        %v178 = vld [vmem:[%s169 + $0x30] sm:$0xff]
        %v179 = vld [vmem:[%s169 + $0x38] sm:$0xff]
        %v180 = vld [vmem:[%s169 + $0x40] sm:$0xff]
        %v181 = vld [vmem:[%s169 + $0x48] sm:$0xff]
        %v182 = vld [vmem:[%s169 + $0x50] sm:$0xff]
        %v183 = vld [vmem:[%s169 + $0x58] sm:$0xff]
        %v184 = vld [vmem:[%s169 + $0x60] sm:$0xff]
        %v185 = vld [vmem:[%s169 + $0x68] sm:$0xff]
        %v186 = vld [vmem:[%s169 + $0x70] sm:$0xff]
        %v187 = vld [vmem:[%s169 + $0x78] sm:$0xff]
        %v188 = vld [vmem:[%s1] sm:$0xff]
        %v189 = vld [vmem:[%s1 + $0x8] sm:$0xff]
        %v190 = vld [vmem:[%s1 + $0x10] sm:$0xff]
        %v191 = vld [vmem:[%s1 + $0x18] sm:$0xff]
        %v192 = vld [vmem:[%s1 + $0x20] sm:$0xff]
        %v193 = vld [vmem:[%s1 + $0x28] sm:$0xff]
        %v194 = vld [vmem:[%s1 + $0x30] sm:$0xff]
        %v195 = vld [vmem:[%s1 + $0x38] sm:$0xff]
        %v196 = vld [vmem:[%s1 + $0x40] sm:$0xff]
        %v197 = vld [vmem:[%s1 + $0x48] sm:$0xff]
        %v198 = vld [vmem:[%s1 + $0x50] sm:$0xff]
        %v199 = vld [vmem:[%s1 + $0x58] sm:$0xff]
        %v200 = vld [vmem:[%s1 + $0x60] sm:$0xff]
        %v201 = vld [vmem:[%s1 + $0x68] sm:$0xff]
        %v202 = vld [vmem:[%s1 + $0x70] sm:$0xff]
        %v203 = vld [vmem:[%s1 + $0x78] sm:$0xff]
        %v204 = vld [vmem:[%s2] sm:$0x1]
        %v206 = vlaneseq
        %v207 = vshrl.u32 %v206, 7
        %v208 = vsub.s32 0, %v207
        %v209 = vrot.slane %v204, %v208
        %vm211 = vcmask 523264
        %v213 = vsel %vm211, %v172, 0
        %v216 = vsel %vm211, %v173, 0
        %v219 = vsel %vm211, %v174, 0
        %v222 = vsel %vm211, %v175, 0
        %v225 = vsel %vm211, %v176, 0
        %v228 = vsel %vm211, %v177, 0
        %v231 = vsel %vm211, %v178, 0
        %v234 = vsel %vm211, %v179, 0
        %v237 = vsel %vm211, %v180, 0
        %v240 = vsel %vm211, %v181, 0
        %v243 = vsel %vm211, %v182, 0
        %v246 = vsel %vm211, %v183, 0
        %v249 = vsel %vm211, %v184, 0
        %v252 = vsel %vm211, %v185, 0
        %v255 = vsel %vm211, %v186, 0
        %v258 = vsel %vm211, %v187, 0
        %v261 = vsel %vm211, %v188, 0
        %v264 = vsel %vm211, %v189, 0
        %v267 = vsel %vm211, %v190, 0
        %v270 = vsel %vm211, %v191, 0
        %v273 = vsel %vm211, %v192, 0
        %v276 = vsel %vm211, %v193, 0
        %v279 = vsel %vm211, %v194, 0
        %v282 = vsel %vm211, %v195, 0
        %v285 = vsel %vm211, %v196, 0
        %v288 = vsel %vm211, %v197, 0
        %v291 = vsel %vm211, %v198, 0
        %v294 = vsel %vm211, %v199, 0
        %v297 = vsel %vm211, %v200, 0
        %v300 = vsel %vm211, %v201, 0
        %v303 = vsel %vm211, %v202, 0
        %v306 = vsel %vm211, %v203, 0
        %308 = vmatprep.subr.mxu0 0.0
        %309 = vmatpush1.xpose.msra.mxu0 %v306
        %310 = vmatprep.subr.mxu0 0.0
        %311 = vmatpush1.xpose.msra.mxu0 %v303
        %312 = vmatprep.subr.mxu0 0.0
        %313 = vmatpush1.xpose.msra.mxu0 %v300
        %314 = vmatprep.subr.mxu0 0.0
        %315 = vmatpush1.xpose.msra.mxu0 %v297
        %316 = vmatprep.subr.mxu0 0.0
        %317 = vmatpush1.xpose.msra.mxu0 %v294
        %318 = vmatprep.subr.mxu0 0.0
        %319 = vmatpush1.xpose.msra.mxu0 %v291
        %320 = vmatprep.subr.mxu0 0.0
        %321 = vmatpush1.xpose.msra.mxu0 %v288
        %322 = vmatprep.subr.mxu0 0.0
        %323 = vmatpush1.xpose.msra.mxu0 %v285
        %324 = vmatprep.subr.mxu0 0.0
        %325 = vmatpush1.xpose.msra.mxu0 %v282
        %326 = vmatprep.subr.mxu0 0.0
        %327 = vmatpush1.xpose.msra.mxu0 %v279
        %328 = vmatprep.subr.mxu0 0.0
        %329 = vmatpush1.xpose.msra.mxu0 %v276
        %330 = vmatprep.subr.mxu0 0.0
        %331 = vmatpush1.xpose.msra.mxu0 %v273
        %332 = vmatprep.subr.mxu0 0.0
        %333 = vmatpush1.xpose.msra.mxu0 %v270
        %334 = vmatprep.subr.mxu0 0.0
        %335 = vmatpush1.xpose.msra.mxu0 %v267
        %336 = vmatprep.subr.mxu0 0.0
        %337 = vmatpush1.xpose.msra.mxu0 %v264
        %338 = vmatprep.subr.mxu0 0.0
        %339 = vmatpush1.xpose.msra.mxu0 %v261
        %340 = vmatprep.subr.mxu0 0.0
        %341 = vmatpush2.xpose.msra.mxu0 0.0
        %342 = vmatprep.subr.mxu0 0.0
        %343 = vmatpush2.xpose.msra.mxu0 0.0
        %344 = vmatprep.subr.mxu0 0.0
        %345 = vmatpush2.xpose.msra.mxu0 0.0
        %346 = vmatprep.subr.mxu0 0.0
        %347 = vmatpush2.xpose.msra.mxu0 0.0
        %348 = vmatprep.subr.mxu0 0.0
        %349 = vmatpush2.xpose.msra.mxu0 0.0
        %350 = vmatprep.subr.mxu0 0.0
        %351 = vmatpush2.xpose.msra.mxu0 0.0
        %352 = vmatprep.subr.mxu0 0.0
        %353 = vmatpush2.xpose.msra.mxu0 0.0
        %354 = vmatprep.subr.mxu0 0.0
        %355 = vmatpush2.xpose.msra.mxu0 0.0
        %356 = vmatprep.subr.mxu0 0.0
        %357 = vmatpush2.xpose.msra.mxu0 0.0
        %358 = vmatprep.subr.mxu0 0.0
        %359 = vmatpush2.xpose.msra.mxu0 0.0
        %360 = vmatprep.subr.mxu0 0.0
        %361 = vmatpush2.xpose.msra.mxu0 0.0
        %362 = vmatprep.subr.mxu0 0.0
        %363 = vmatpush2.xpose.msra.mxu0 0.0
        %364 = vmatprep.subr.mxu0 0.0
        %365 = vmatpush2.xpose.msra.mxu0 0.0
        %366 = vmatprep.subr.mxu0 0.0
        %367 = vmatpush2.xpose.msra.mxu0 0.0
        %368 = vmatprep.subr.mxu0 0.0
        %369 = vmatpush2.xpose.msra.mxu0 0.0
        %370 = vmatprep.subr.mxu0 0.0
        %371 = vmatpush2.xpose.msra.mxu0 0.0
        %372 = vmatprep.mubr.f32.mxu0 0.0
        %373 = vmatmul.mubr.f32.gmra.mxu0 %v213
        %v374 = vpop.f32.mrf.mxu0
        %v375 = vadd.f32 %v209, %v374
        %v376 = vpop.f32.mrf.mxu0
        %377 = vmatprep.mubr.f32.mxu0 0.0
        %378 = vmatmul.mubr.f32.gmra.mxu0 %v216
        %v379 = vpop.f32.mrf.mxu0
        %v380 = vadd.f32 %v209, %v379
        %v381 = vpop.f32.mrf.mxu0
        %382 = vmatprep.mubr.f32.mxu0 0.0
        %383 = vmatmul.mubr.f32.gmra.mxu0 %v219
        %v384 = vpop.f32.mrf.mxu0
        %v385 = vadd.f32 %v209, %v384
        %v386 = vpop.f32.mrf.mxu0
        %387 = vmatprep.mubr.f32.mxu0 0.0
        %388 = vmatmul.mubr.f32.gmra.mxu0 %v222
        %v389 = vpop.f32.mrf.mxu0
        %v390 = vadd.f32 %v209, %v389
        %v391 = vpop.f32.mrf.mxu0
        %392 = vmatprep.mubr.f32.mxu0 0.0
        %393 = vmatmul.mubr.f32.gmra.mxu0 %v225
        %v394 = vpop.f32.mrf.mxu0
        %v395 = vadd.f32 %v209, %v394
        %v396 = vpop.f32.mrf.mxu0
        %397 = vmatprep.mubr.f32.mxu0 0.0
        %398 = vmatmul.mubr.f32.gmra.mxu0 %v228
        %v399 = vpop.f32.mrf.mxu0
        %v400 = vadd.f32 %v209, %v399
        %v401 = vpop.f32.mrf.mxu0
        %402 = vmatprep.mubr.f32.mxu0 0.0
        %403 = vmatmul.mubr.f32.gmra.mxu0 %v231
        %v404 = vpop.f32.mrf.mxu0
        %v405 = vadd.f32 %v209, %v404
        %v406 = vpop.f32.mrf.mxu0
        %407 = vmatprep.mubr.f32.mxu0 0.0
        %408 = vmatmul.mubr.f32.gmra.mxu0 %v234
        %v409 = vpop.f32.mrf.mxu0
        %v410 = vadd.f32 %v209, %v409
        %v411 = vpop.f32.mrf.mxu0
        %412 = vmatprep.mubr.f32.mxu0 0.0
        %413 = vmatmul.mubr.f32.gmra.mxu0 %v237
        %v414 = vpop.f32.mrf.mxu0
        %v415 = vadd.f32 %v209, %v414
        %v416 = vpop.f32.mrf.mxu0
        %417 = vmatprep.mubr.f32.mxu0 0.0
        %418 = vmatmul.mubr.f32.gmra.mxu0 %v240
        %v419 = vpop.f32.mrf.mxu0
        %v420 = vadd.f32 %v209, %v419
        %v421 = vpop.f32.mrf.mxu0
        %422 = vmatprep.mubr.f32.mxu0 0.0
        %423 = vmatmul.mubr.f32.gmra.mxu0 %v243
        %v424 = vpop.f32.mrf.mxu0
        %v425 = vadd.f32 %v209, %v424
        %v426 = vpop.f32.mrf.mxu0
        %427 = vmatprep.mubr.f32.mxu0 0.0
        %428 = vmatmul.mubr.f32.gmra.mxu0 %v246
        %v429 = vpop.f32.mrf.mxu0
        %v430 = vadd.f32 %v209, %v429
        %v431 = vpop.f32.mrf.mxu0
        %432 = vmatprep.mubr.f32.mxu0 0.0
        %433 = vmatmul.mubr.f32.gmra.mxu0 %v249
        %v434 = vpop.f32.mrf.mxu0
        %v435 = vadd.f32 %v209, %v434
        %v436 = vpop.f32.mrf.mxu0
        %437 = vmatprep.mubr.f32.mxu0 0.0
        %438 = vmatmul.mubr.f32.gmra.mxu0 %v252
        %v439 = vpop.f32.mrf.mxu0
        %v440 = vadd.f32 %v209, %v439
        %v441 = vpop.f32.mrf.mxu0
        %442 = vmatprep.mubr.f32.mxu0 0.0
        %443 = vmatmul.mubr.f32.gmra.mxu0 %v255
        %v444 = vpop.f32.mrf.mxu0
        %v445 = vadd.f32 %v209, %v444
        %v446 = vpop.f32.mrf.mxu0
        %447 = vmatprep.mubr.f32.mxu0 0.0
        %448 = vmatmul.mubr.f32.gmra.mxu0 %v258
        %v449 = vpop.f32.mrf.mxu0
        %v450 = vadd.f32 %v209, %v449
        %v451 = vpop.f32.mrf.mxu0
        %452 = vdwg.mxu0
        %453 = vst [vmem:[%s164] sm:$0xff] %v375
        %454 = vst [vmem:[%s164 + $0x8] sm:$0xff] %v380
        %455 = vst [vmem:[%s164 + $0x10] sm:$0xff] %v385
        %456 = vst [vmem:[%s164 + $0x18] sm:$0xff] %v390
        %457 = vst [vmem:[%s164 + $0x20] sm:$0xff] %v395
        %458 = vst [vmem:[%s164 + $0x28] sm:$0xff] %v400
        %459 = vst [vmem:[%s164 + $0x30] sm:$0xff] %v405
        %460 = vst [vmem:[%s164 + $0x38] sm:$0xff] %v410
        %461 = vst [vmem:[%s164 + $0x40] sm:$0xff] %v415
        %462 = vst [vmem:[%s164 + $0x48] sm:$0xff] %v420
        %463 = vst [vmem:[%s164 + $0x50] sm:$0xff] %v425
        %464 = vst [vmem:[%s164 + $0x58] sm:$0xff] %v430
        %465 = vst [vmem:[%s164 + $0x60] sm:$0xff] %v435
        %466 = vst [vmem:[%s164 + $0x68] sm:$0xff] %v440
        %467 = vst [vmem:[%s164 + $0x70] sm:$0xff] %v445
        %468 = vst [vmem:[%s164 + $0x78] sm:$0xff] %v450
        %s469 = sand.u32 %s93, 1
        %s470 = scalar_lea.sflag [#allocation3], %s469
        %s471 = sand.u32 %s93, 1
        %s472 = smul.addr %s471, 128
        %s473 = scalar_lea.vmem [#allocation2], %s472
        // Predicated region
        $region33: #{tpu_custom_call.1} parent=31 // pred_check
          %p474 = pneg %p103
        $region34: #{tpu_custom_call.1} parent=31 // pred_check_branch
          %476 = sbr.rel (%p474) target = $region36
        $region35: #{tpu_custom_call.1} parent=31 // pred_region
          %s477 = smul.u32 16, %s17
          %s479 = ssub.s32 2048, 2048
          %480 = vsyncadd %s470, %s479
          %s481 = smul.addr %s477, 128
          %s482 = scalar_lea.hbm %s3, %s481
          %s483 = sshll.u32 %s473, 4
          %s484 = int_to_ptr.vmem [resolvable:$true] %s483
          %489 = dma.vmem_to_hbm [thread:$0]  %s484, 2048, %s482, %s470, 128, 128, 8
        $region36: #{tpu_custom_call.1} parent=31 // pred_fallthru
          _
      $region32: #{tpu_custom_call.1} parent=5 // pred_fallthru
        _
      %p490 = scmp.le.s32.totalorder 2, %s12
      // Predicated region
      $region37: #{tpu_custom_call.1} parent=5 // pred_check
        %p491 = pneg %p490
      $region38: #{tpu_custom_call.1} parent=5 // pred_check_branch
        %493 = sbr.rel (%p491) target = $region40
      $region39: #{tpu_custom_call.1} parent=5 // pred_region
        %s494 = ssub.s32 %s12, 2
        // Predicated region
        $region41: #{tpu_custom_call.1} parent=39 // pred_check
          %p495 = pneg %p109
        $region42: #{tpu_custom_call.1} parent=39 // pred_check_branch
          %497 = sbr.rel (%p495) target = $region44
        $region43: #{tpu_custom_call.1} parent=39 // pred_region
          %s498 = sand.u32 %s94, 1
          %s499 = scalar_lea.sflag [#allocation3], %s498
          %s500 = sand.u32 %s94, 1
          %s501 = smul.addr %s500, 128
          %s502 = scalar_lea.vmem [#allocation2], %s501
          %503 = dma.done %s499, 2048
        $region44: #{tpu_custom_call.1} parent=39 // pred_fallthru
          _
      $region40: #{tpu_custom_call.1} parent=5 // pred_fallthru
        _
    $region6: #{tpu_custom_call.1} parent=1 // loop_footer
      %s16 = sadd.s32 1, %s12
    $region7: #{tpu_custom_call.1} parent=1 // loop_footer_branch
      %11 = sbr.rel target = $region3
    $region8: #{tpu_custom_call.1} parent=1 // loop_exit
      _
    %504 = vsyncpa [#allocation3], 1
    %s505 = scalar_lea.sflag [#allocation3], 1
    %506 = vsyncpa %s505, 1

</llo_original>
